<compile_context>
chip_gen: v7x
topology: tpu7x:2x2x1
jax: 0.10.0
libtpu: 0.0.40
codegen_flags: <defaults>
</compile_context>

<pallas_src>
import jax
import jax.numpy as jnp
from jax.experimental import pallas as pl
from jax.experimental.pallas import tpu as pltpu


def csph_kernel(x_ref, w1s_ref, w4_ref, bias_ref, b4_ref, b2_ref):
    # x_ref    : (Bt, num_bins, tile_hw)   channels on sublanes, pixels on lanes
    # w1s_ref  : (k, num_bins)             diag(w2) @ W1 (fused encoding)
    # w4_ref   : (num_bins, k)             decoding conv weight
    # bias_ref : (num_bins, 1)             decoding conv bias (lane broadcast)
    # b4_ref   : (Bt, num_bins, tile_hw)   lane-dense output
    # b2_ref   : (Bt, k, tile_hw)          lane-dense output
    w1s = w1s_ref[...]
    w4 = w4_ref[...]
    bias = bias_ref[...]
    bt = x_ref.shape[0]
    k = w1s.shape[0]

    for b in range(bt):  # Bt is small (<= 8) and static -> cheap unroll
        x = x_ref[b]                                              # (num_bins, T)
        b2 = jnp.dot(w1s, x, preferred_element_type=jnp.float32)  # (k, T) on MXU
        b2_ref[b] = b2.astype(b2_ref.dtype)

        if k <= 8:
            # Second contraction (width k) as k VPU broadcast-multiply-adds:
            # uses the slack VALU slots of a mem-bound kernel instead of a
            # badly-filled K=k MXU matmul.
            b4 = bias
            for i in range(k):
                b4 = b4 + w4[:, i:i + 1] * b2[i:i + 1, :]
        else:
            b4 = jnp.dot(w4, b2, preferred_element_type=jnp.float32) + bias
        b4_ref[b] = jnp.maximum(b4, 0.0).astype(b4_ref.dtype)


def _choose_tiling(B, num_bins, k, HW, *,
                   data_vmem_budget=24 * 1024 * 1024,
                   max_tile_hw=32768, max_bt=8):
    """Pick (Bt, tile_hw) so each grid step moves a big lane-dense block.

    Bytes per pixel (f32) = x[num_bins] + b4[num_bins] + b2[k]; the 2x factor
    accounts for double buffering.  Budget stays well under v7x's 64 MiB
    physical VMEM (and under the explicit vmem_limit_bytes below).
    """
    bytes_per_px = (2 * num_bins + k) * 4
    px_budget = max(128, data_vmem_budget // (2 * bytes_per_px))

    if HW <= px_budget:
        tile_hw = HW                                   # full-dim block: always legal
        bt = max(1, min(B, px_budget // HW, max_bt))   # fold batch into the block
    else:
        bt = 1
        tile_hw = max(128, min((px_budget // 128) * 128, max_tile_hw))

    # v7x has two TensorCores sharded over "parallel" grid axes: make sure the
    # grid has at least 2 steps so neither core sits idle.
    if pl.cdiv(B, bt) * pl.cdiv(HW, tile_hw) < 2:
        if B > 1:
            bt = (B + 1) // 2
        elif HW >= 256:
            tile_hw = max(128, ((HW // 2 + 127) // 128) * 128)
    return bt, tile_hw


def csph1d2d_forward(x_nchw, W1, w2, W4, bias4):
    """CSPH1D2DLayer forward, down_factor=1.

    x_nchw : (B, num_bins, Nr, Nc) float32
    W1     : (k, num_bins)   csph1D_encoding.Cmat1D.weight (squeezed)
    w2     : (k,)            csph2D_encoding.Cmat2D.weight (depthwise scalars)
    W4     : (num_bins, k)   csph1D_decoding[0].weight (squeezed)
    bias4  : (num_bins,)     csph1D_decoding[0].bias
    Returns (B4, B2) with shapes (B, num_bins, Nr, Nc) and (B, k, Nr, Nc).
    """
    B, num_bins, Nr, Nc = x_nchw.shape
    k = W1.shape[0]
    HW = Nr * Nc

    # Host-side weight fusion (tiny, exact): b2 = diag(w2) @ (W1 @ x) = W1s @ x.
    W1s = (w2.reshape(k, 1) * W1).astype(jnp.float32)          # (k, num_bins)
    W4f = W4.astype(jnp.float32)                               # (num_bins, k)
    bias_col = bias4.reshape(num_bins, 1).astype(jnp.float32)  # (num_bins, 1)

    # NCHW -> (B, num_bins, HW): free reshape, no transpose / HBM round trip.
    x3 = x_nchw.reshape(B, num_bins, HW)

    bt, tile_hw = _choose_tiling(B, num_bins, k, HW)
    grid = (pl.cdiv(B, bt), pl.cdiv(HW, tile_hw))

    # Advisory cost estimate for the XLA scheduler.
    flops = int(B) * int(HW) * (4 * k * num_bins + 2 * num_bins)
    bytes_accessed = (int(B) * int(HW) * (2 * num_bins + k) * 4
                      + (2 * k * num_bins + num_bins) * 4)

    # NOTE: bf16 weights/outputs would cut traffic ~2x (esp. on v5e) if the
    # downstream accuracy budget allows; kept f32 to match the module exactly.
    b4_flat, b2_flat = pl.pallas_call(
        csph_kernel,
        out_shape=(
            jax.ShapeDtypeStruct((B, num_bins, HW), jnp.float32),
            jax.ShapeDtypeStruct((B, k, HW), jnp.float32),
        ),
        grid_spec=pltpu.PrefetchScalarGridSpec(
            num_scalar_prefetch=0,
            grid=grid,
            in_specs=[
                pl.BlockSpec((bt, num_bins, tile_hw), lambda b, i: (b, 0, i)),
                pl.BlockSpec((k, num_bins), lambda b, i: (0, 0)),
                pl.BlockSpec((num_bins, k), lambda b, i: (0, 0)),
                pl.BlockSpec((num_bins, 1), lambda b, i: (0, 0)),
            ],
            out_specs=[
                pl.BlockSpec((bt, num_bins, tile_hw), lambda b, i: (b, 0, i)),
                pl.BlockSpec((bt, k, tile_hw), lambda b, i: (b, 0, i)),
            ],
        ),
        compiler_params=pltpu.CompilerParams(
            dimension_semantics=("parallel", "parallel"),
            vmem_limit_bytes=40 * 1024 * 1024,
        ),
        cost_estimate=pl.CostEstimate(flops=flops, transcendentals=0,
                                      bytes_accessed=bytes_accessed),
    )(x3, W1s, W4f, bias_col)

    B4 = b4_flat.reshape(B, num_bins, Nr, Nc)
    B2 = b2_flat.reshape(B, k, Nr, Nc)
    return B4, B2


def reference_forward(x_nchw, W1, w2, W4, bias4):
    """Pure-JAX, unfused reference of CSPH1D2DLayer.forward (down_factor=1)."""
    b1 = jnp.einsum("kc,bchw->bkhw", W1, x_nchw)                 # 1x1 conv, no bias
    b2 = b1 * w2.reshape(1, -1, 1, 1)                            # depthwise 1x1
    b3 = b2                                                      # upsample x1
    b4 = jnp.einsum("ok,bkhw->bohw", W4, b3) + bias4.reshape(1, -1, 1, 1)
    return jnp.maximum(b4, 0.0), b2


if __name__ == "__main__":
    # Small shapes consistent with the module's forward (Batch, Nt=num_bins, Nr, Nc)
    B, num_bins, Nr, Nc = 2, 32, 16, 16
    k = 4

    key = jax.random.PRNGKey(0)
    kx, k1, k2, k4 = jax.random.split(key, 4)

    x = jax.random.uniform(kx, (B, num_bins, Nr, Nc), dtype=jnp.float32)

    # Deterministic parameter init (synthetic; mirrors the module's shapes):
    # csph1D_encoding.Cmat1D.weight -> (k, num_bins, 1, 1), 'Rand'-style init
    W1 = jnp.clip(jax.random.normal(k1, (k, num_bins), jnp.float32) * 0.01,
                  -1.0, 1.0)
    # csph2D_encoding.Cmat2D.weight -> (k, 1, 1, 1) depthwise scalars
    w2 = jax.random.normal(k2, (k,), jnp.float32) * 0.5
    # csph1D_decoding[0].weight -> (num_bins, k, 1, 1), kaiming_normal_ fan_in relu
    W4 = jax.random.normal(k4, (num_bins, k), jnp.float32) * jnp.sqrt(2.0 / k)
    # csph1D_decoding[0].bias -> zeros (matches nn.init.constant_(bias, 0.0))
    bias4 = jnp.zeros((num_bins,), jnp.float32)

    B4, B2 = csph1d2d_forward(x, W1, w2, W4, bias4)
    jax.block_until_ready((B4, B2))

    # Sanity check against a pure-JAX (unfused) reference.
    B4_ref, B2_ref = reference_forward(x, W1, w2, W4, bias4)
    assert B4.shape == (B, num_bins, Nr, Nc)
    assert B2.shape == (B, k, Nr, Nc)
    assert jnp.allclose(B4, B4_ref, atol=1e-4, rtol=1e-4)
    assert jnp.allclose(B2, B2_ref, atol=1e-4, rtol=1e-4)

    print("KERNEL_OK")
</pallas_src>

<mosaic_0001>
module attributes {stable_mosaic.version = 11 : i64} {
  func.func @csph_kernel(%arg0: i32, %arg1: i32, %arg2: memref<1x32x256xf32, #tpu.memory_space<vmem>>, %arg3: memref<4x32xf32, #tpu.memory_space<vmem>>, %arg4: memref<32x4xf32, #tpu.memory_space<vmem>>, %arg5: memref<32x1xf32, #tpu.memory_space<vmem>>, %arg6: memref<1x32x256xf32, #tpu.memory_space<vmem>>, %arg7: memref<1x4x256xf32, #tpu.memory_space<vmem>>) attributes {dimension_semantics = [#tpu.dimension_semantics<parallel>, #tpu.dimension_semantics<parallel>], iteration_bounds = array<i64: 2, 1>, scalar_prefetch = 0 : i64, scratch_operands = 0 : i64, tpu.core_type = #tpu.core_type<tc>, window_params = [{transform_indices = @transform_0, window_bounds = array<i64: 1, 32, 256>}, {pipeline_mode = #tpu.pipeline_mode<synchronous>, transform_indices = @transform_1, window_bounds = array<i64: 4, 32>}, {pipeline_mode = #tpu.pipeline_mode<synchronous>, transform_indices = @transform_2, window_bounds = array<i64: 32, 4>}, {pipeline_mode = #tpu.pipeline_mode<synchronous>, transform_indices = @transform_3, window_bounds = array<i64: 32, 1>}, {transform_indices = @transform_4, window_bounds = array<i64: 1, 32, 256>}, {transform_indices = @transform_5, window_bounds = array<i64: 1, 4, 256>}]} {
    %c0 = arith.constant 0 : index
    %c0_0 = arith.constant 0 : index
    %0 = vector.load %arg3[%c0, %c0_0] : memref<4x32xf32, #tpu.memory_space<vmem>>, vector<4x32xf32>
    %c0_1 = arith.constant 0 : index
    %c0_2 = arith.constant 0 : index
    %1 = vector.load %arg4[%c0_1, %c0_2] : memref<32x4xf32, #tpu.memory_space<vmem>>, vector<32x4xf32>
    %c0_3 = arith.constant 0 : index
    %c0_4 = arith.constant 0 : index
    %2 = vector.load %arg5[%c0_3, %c0_4] : memref<32x1xf32, #tpu.memory_space<vmem>>, vector<32x1xf32>
    %c0_5 = arith.constant 0 : index
    %c0_6 = arith.constant 0 : index
    %c0_7 = arith.constant 0 : index
    %3 = vector.load %arg2[%c0_5, %c0_6, %c0_7] : memref<1x32x256xf32, #tpu.memory_space<vmem>>, vector<1x32x256xf32>
    %4 = vector.shape_cast %3 : vector<1x32x256xf32> to vector<32x256xf32>
    %cst = arith.constant dense<0.000000e+00> : vector<4x256xf32>
    %5 = tpu.matmul %0, %4, %cst {dimension_numbers = #tpu.dot_dimension_numbers<[1], [0], [0], [1], [0, 0, 1, 1], [], []>} : vector<4x32xf32>, vector<32x256xf32>, vector<4x256xf32> -> vector<4x256xf32>
    %c0_8 = arith.constant 0 : index
    %c0_9 = arith.constant 0 : index
    %c0_10 = arith.constant 0 : index
    %6 = vector.load %arg7[%c0_8, %c0_9, %c0_10] : memref<1x4x256xf32, #tpu.memory_space<vmem>>, vector<1x4x256xf32>
    %7 = vector.shape_cast %6 : vector<1x4x256xf32> to vector<4x256xf32>
    %8 = vector.shape_cast %5 : vector<4x256xf32> to vector<1x4x256xf32>
    tpu.vector_store %arg7[%c0_8, %c0_9, %c0_10], %8 {strides = array<i32>} : memref<1x4x256xf32, #tpu.memory_space<vmem>>, vector<1x4x256xf32>,
    %9 = vector.extract_strided_slice %1 {offsets = [0, 0], sizes = [32, 1], strides = [1, 1]} : vector<32x4xf32> to vector<32x1xf32>
    %10 = vector.extract_strided_slice %5 {offsets = [0, 0], sizes = [1, 256], strides = [1, 1]} : vector<4x256xf32> to vector<1x256xf32>
    %11 = vector.broadcast %9 : vector<32x1xf32> to vector<32x256xf32>
    %12 = vector.broadcast %10 : vector<1x256xf32> to vector<32x256xf32>
    %13 = arith.mulf %11, %12 : vector<32x256xf32>
    %14 = vector.broadcast %2 : vector<32x1xf32> to vector<32x256xf32>
    %15 = arith.addf %14, %13 : vector<32x256xf32>
    %16 = vector.extract_strided_slice %1 {offsets = [0, 1], sizes = [32, 1], strides = [1, 1]} : vector<32x4xf32> to vector<32x1xf32>
    %17 = vector.extract_strided_slice %5 {offsets = [1, 0], sizes = [1, 256], strides = [1, 1]} : vector<4x256xf32> to vector<1x256xf32>
    %18 = vector.broadcast %16 : vector<32x1xf32> to vector<32x256xf32>
    %19 = vector.broadcast %17 : vector<1x256xf32> to vector<32x256xf32>
    %20 = arith.mulf %18, %19 : vector<32x256xf32>
    %21 = arith.addf %15, %20 : vector<32x256xf32>
    %22 = vector.extract_strided_slice %1 {offsets = [0, 2], sizes = [32, 1], strides = [1, 1]} : vector<32x4xf32> to vector<32x1xf32>
    %23 = vector.extract_strided_slice %5 {offsets = [2, 0], sizes = [1, 256], strides = [1, 1]} : vector<4x256xf32> to vector<1x256xf32>
    %24 = vector.broadcast %22 : vector<32x1xf32> to vector<32x256xf32>
    %25 = vector.broadcast %23 : vector<1x256xf32> to vector<32x256xf32>
    %26 = arith.mulf %24, %25 : vector<32x256xf32>
    %27 = arith.addf %21, %26 : vector<32x256xf32>
    %28 = vector.extract_strided_slice %1 {offsets = [0, 3], sizes = [32, 1], strides = [1, 1]} : vector<32x4xf32> to vector<32x1xf32>
    %29 = vector.extract_strided_slice %5 {offsets = [3, 0], sizes = [1, 256], strides = [1, 1]} : vector<4x256xf32> to vector<1x256xf32>
    %30 = vector.broadcast %28 : vector<32x1xf32> to vector<32x256xf32>
    %31 = vector.broadcast %29 : vector<1x256xf32> to vector<32x256xf32>
    %32 = arith.mulf %30, %31 : vector<32x256xf32>
    %33 = arith.addf %27, %32 : vector<32x256xf32>
    %cst_11 = arith.constant 0.000000e+00 : f32
    %34 = vector.broadcast %cst_11 : f32 to vector<32x256xf32>
    %35 = arith.maximumf %33, %34 : vector<32x256xf32>
    %c0_12 = arith.constant 0 : index
    %c0_13 = arith.constant 0 : index
    %c0_14 = arith.constant 0 : index
    %36 = vector.load %arg6[%c0_12, %c0_13, %c0_14] : memref<1x32x256xf32, #tpu.memory_space<vmem>>, vector<1x32x256xf32>
    %37 = vector.shape_cast %36 : vector<1x32x256xf32> to vector<32x256xf32>
    %38 = vector.shape_cast %35 : vector<32x256xf32> to vector<1x32x256xf32>
    tpu.vector_store %arg6[%c0_12, %c0_13, %c0_14], %38 {strides = array<i32>} : memref<1x32x256xf32, #tpu.memory_space<vmem>>, vector<1x32x256xf32>,
    return
  }
  func.func @transform_0(%arg0: i32, %arg1: i32) -> (i32, i32, i32) {
    %c0_i32 = arith.constant 0 : i32
    %c0_i32_0 = arith.constant 0 : i32
    return %arg0, %c0_i32, %arg1 : i32, i32, i32
  }
  func.func @transform_1(%arg0: i32, %arg1: i32) -> (i32, i32) {
    %c0_i32 = arith.constant 0 : i32
    %c0_i32_0 = arith.constant 0 : i32
    %c0_i32_1 = arith.constant 0 : i32
    return %c0_i32, %c0_i32_0 : i32, i32
  }
  func.func @transform_2(%arg0: i32, %arg1: i32) -> (i32, i32) {
    %c0_i32 = arith.constant 0 : i32
    %c0_i32_0 = arith.constant 0 : i32
    %c0_i32_1 = arith.constant 0 : i32
    return %c0_i32, %c0_i32_0 : i32, i32
  }
  func.func @transform_3(%arg0: i32, %arg1: i32) -> (i32, i32) {
    %c0_i32 = arith.constant 0 : i32
    %c0_i32_0 = arith.constant 0 : i32
    %c0_i32_1 = arith.constant 0 : i32
    return %c0_i32, %c0_i32_0 : i32, i32
  }
  func.func @transform_4(%arg0: i32, %arg1: i32) -> (i32, i32, i32) {
    %c0_i32 = arith.constant 0 : i32
    %c0_i32_0 = arith.constant 0 : i32
    return %arg0, %c0_i32, %arg1 : i32, i32, i32
  }
  func.func @transform_5(%arg0: i32, %arg1: i32) -> (i32, i32, i32) {
    %c0_i32 = arith.constant 0 : i32
    %c0_i32_0 = arith.constant 0 : i32
    return %arg0, %c0_i32, %arg1 : i32, i32, i32
  }
}

</mosaic_0001>

<llo_original>
// kernel: tpu_custom_call.1
$region0: #{tpu_custom_call.1}
  #allocation0 [shape = 'u32[]', space=smem, size = 0x4, offset = 0x4, fixed_abs, tag = 'smem constant byte address 0x4 - core index']
  #allocation1 [shape = 'u32[144,128]{1,0:T(1,128)}', space=vmem, size = 0x12000, scoped, tag = 'internal scratch']
  %s0 = inlined_call_operand.hbm [shape: f32[2,32,256], index: 0, kind: input, shape index: {}]
  %s1 = inlined_call_operand.vmem [shape: f32[4,32], index: 1, kind: input, shape index: {}]
  %s2 = inlined_call_operand.vmem [shape: f32[32,4], index: 2, kind: input, shape index: {}]
  %s3 = inlined_call_operand.vmem [shape: f32[32,1], index: 3, kind: input, shape index: {}]
  %s4 = inlined_call_operand.hbm [shape: f32[2,32,256], index: 4, kind: output, shape index: {0}]
  %s5 = inlined_call_operand.hbm [shape: f32[2,4,256], index: 5, kind: output, shape index: {1}]
  %6 = xla_tuple %s4, %s5
  %s7 = sld [smem:[#allocation0]]
  $region61: #{tpu_custom_call.1} parent=0
    _
  %s9 = ssub.s32 1, %s7
  %s10 = scalar_select 0, %s9, %s7
  $region1: #{tpu_custom_call.1} parent=0
    #allocation2 [shape = 'u8[65536]{0}', space=vmem, size = 0x10000, scoped, tag = 'input window, operand 0']
    #allocation3 [shape = 's32[2]{0}', space=sflag, size = 0x8, scoped, tag = 'scoped memory for tpu_custom_call.1']
    #allocation4 [shape = 's32[2]{0}', space=sflag, size = 0x8, scoped, tag = 'scoped memory for tpu_custom_call.1']
    #allocation5 [shape = 'u8[65536]{0}', space=vmem, size = 0x10000, scoped, tag = 'output window, operand 0']
    #allocation6 [shape = 'u8[8192]{0}', space=vmem, size = 0x2000, scoped, tag = 'output window, operand 1']
    #allocation7 [shape = 's32[2]{0}', space=sflag, size = 0x8, scoped, tag = 'scoped memory for tpu_custom_call.1']
    %11 = vsyncpa [#allocation3], 0
    %s12 = scalar_lea.sflag [#allocation3], 1
    %13 = vsyncpa %s12, 0
    %14 = vsyncpa [#allocation4], 0
    %s15 = scalar_lea.sflag [#allocation4], 1
    %16 = vsyncpa %s15, 0
    %17 = vsyncpa [#allocation7], 0
    %s18 = scalar_lea.sflag [#allocation7], 1
    %19 = vsyncpa %s18, 0
    loop: start=0, step=1, limit=4
    $region2: #{tpu_custom_call.1} parent=1 // loop_pre_header
      _
    $region3: #{tpu_custom_call.1} parent=1 // loop_header
      %s21 = sphi 0, %s25
      %p22 = scmp.ge.s32.totalorder %s21, 4
      %s28 = sphi 0, %s40
      %s29 = sphi 0, %s36
      %s30 = sphi 0, %s28
      %s31 = sphi 0, %s29
      %s32 = sphi 0, %s30
      %s33 = sphi 0, %s31
      %s45 = sphi 0, %s47
      %s48 = sphi 0, %s45
      %s49 = sphi 0, %s48
      %s65 = sphi 0, %s49
      %s69 = sphi 0, %s69
      %s71 = sphi 0, %s69
      %s72 = sphi 0, %s71
      %s86 = sphi 0, %s72
      %s90 = sphi 0, %s90
      %s92 = sphi 0, %s90
      %s93 = sphi 0, %s92
      %s107 = sphi 0, %s93
      %s111 = sphi 0, %s111
      %s113 = sphi 0, %s111
      %s114 = sphi 0, %s113
      %s128 = sphi 0, %s114
      %s136 = sphi 0, %s138
      %s139 = sphi 0, %s136
      %s140 = sphi 0, %s139
      %s156 = sphi 0, %s140
      %s164 = sphi 0, %s166
      %s167 = sphi 0, %s164
      %s168 = sphi 0, %s167
      %s184 = sphi 0, %s168
    $region4: #{tpu_custom_call.1} parent=1 // loop_header_branch
      %24 = sbr.rel (%p22) target = $region8
    $region5: #{tpu_custom_call.1} parent=1 // loop_body
      %s26 = ssub.s32 %s21, 1
      %s27 = ssub.s32 %s21, 2
      %s34 = sadd.s32 1, %s29
      %p35 = scmp.ge.s32.totalorder %s34, 1
      %s36 = scalar_select %p35, 0, %s34
      %s37 = sadd.s32 1, %s28
      %s38 = scalar_select %p35, %s37, %s28
      %p39 = scmp.ge.s32.totalorder %s38, 2
      %s40 = scalar_select %p39, 0, %s38
      %s41 = ssub.s32 %s28, %s40
      %s42 = ssub.s32 %s29, %s36
      %s43 = sor.u32 %s41, %s42
      %p44 = scmp.eq.s32.totalorder %s43, 0
      %s46 = sadd.s32 %s45, 1
      %s47 = scalar_select %p44, %s45, %s46
      %p50 = pneg %p44
      %p51 = scmp.eq.s32.totalorder %s21, 1
      %p52 = por %p50, %p51
      %p53 = scmp.ne.s32.totalorder %s45, %s48
      %p54 = scmp.eq.s32.totalorder %s21, 0
      %p55 = por %p53, %p54
      %p56 = scmp.ne.s32.totalorder %s45, %s48
      %p57 = scmp.eq.s32.totalorder %s26, 1
      %p58 = por %p56, %p57
      %p59 = scmp.ne.s32.totalorder %s48, %s49
      %p60 = scmp.eq.s32.totalorder %s26, 0
      %p61 = por %p59, %p60
      %p62 = scmp.ne.s32.totalorder %s48, %s49
      %p63 = scmp.eq.s32.totalorder %s27, 1
      %p64 = por %p62, %p63
      %p66 = scmp.ne.s32.totalorder %s49, %s65
      %p67 = scmp.eq.s32.totalorder %s27, 0
      %p68 = por %p66, %p67
      %s70 = sadd.s32 %s69, 1
      %p73 = scmp.eq.s32.totalorder %s21, 1
      %p74 = scmp.ne.s32.totalorder %s69, %s71
      %p75 = scmp.eq.s32.totalorder %s21, 0
      %p76 = por %p74, %p75
      %p77 = scmp.ne.s32.totalorder %s69, %s71
      %p78 = scmp.eq.s32.totalorder %s26, 1
      %p79 = por %p77, %p78
      %p80 = scmp.ne.s32.totalorder %s71, %s72
      %p81 = scmp.eq.s32.totalorder %s26, 0
      %p82 = por %p80, %p81
      %p83 = scmp.ne.s32.totalorder %s71, %s72
      %p84 = scmp.eq.s32.totalorder %s27, 1
      %p85 = por %p83, %p84
      %p87 = scmp.ne.s32.totalorder %s72, %s86
      %p88 = scmp.eq.s32.totalorder %s27, 0
      %p89 = por %p87, %p88
      %s91 = sadd.s32 %s90, 1
      %p94 = scmp.eq.s32.totalorder %s21, 1
      %p95 = scmp.ne.s32.totalorder %s90, %s92
      %p96 = scmp.eq.s32.totalorder %s21, 0
      %p97 = por %p95, %p96
      %p98 = scmp.ne.s32.totalorder %s90, %s92
      %p99 = scmp.eq.s32.totalorder %s26, 1
      %p100 = por %p98, %p99
      %p101 = scmp.ne.s32.totalorder %s92, %s93
      %p102 = scmp.eq.s32.totalorder %s26, 0
      %p103 = por %p101, %p102
      %p104 = scmp.ne.s32.totalorder %s92, %s93
      %p105 = scmp.eq.s32.totalorder %s27, 1
      %p106 = por %p104, %p105
      %p108 = scmp.ne.s32.totalorder %s93, %s107
      %p109 = scmp.eq.s32.totalorder %s27, 0
      %p110 = por %p108, %p109
      %s112 = sadd.s32 %s111, 1
      %p115 = scmp.eq.s32.totalorder %s21, 1
      %p116 = scmp.ne.s32.totalorder %s111, %s113
      %p117 = scmp.eq.s32.totalorder %s21, 0
      %p118 = por %p116, %p117
      %p119 = scmp.ne.s32.totalorder %s111, %s113
      %p120 = scmp.eq.s32.totalorder %s26, 1
      %p121 = por %p119, %p120
      %p122 = scmp.ne.s32.totalorder %s113, %s114
      %p123 = scmp.eq.s32.totalorder %s26, 0
      %p124 = por %p122, %p123
      %p125 = scmp.ne.s32.totalorder %s113, %s114
      %p126 = scmp.eq.s32.totalorder %s27, 1
      %p127 = por %p125, %p126
      %p129 = scmp.ne.s32.totalorder %s114, %s128
      %p130 = scmp.eq.s32.totalorder %s27, 0
      %p131 = por %p129, %p130
      %s132 = ssub.s32 %s28, %s40
      %s133 = ssub.s32 %s29, %s36
      %s134 = sor.u32 %s132, %s133
      %p135 = scmp.eq.s32.totalorder %s134, 0
      %s137 = sadd.s32 %s136, 1
      %s138 = scalar_select %p135, %s136, %s137
      %p141 = pneg %p135
      %p142 = scmp.eq.s32.totalorder %s21, 1
      %p143 = por %p141, %p142
      %p144 = scmp.ne.s32.totalorder %s136, %s139
      %p145 = scmp.eq.s32.totalorder %s21, 0
      %p146 = por %p144, %p145
      %p147 = scmp.ne.s32.totalorder %s136, %s139
      %p148 = scmp.eq.s32.totalorder %s26, 1
      %p149 = por %p147, %p148
      %p150 = scmp.ne.s32.totalorder %s139, %s140
      %p151 = scmp.eq.s32.totalorder %s26, 0
      %p152 = por %p150, %p151
      %p153 = scmp.ne.s32.totalorder %s139, %s140
      %p154 = scmp.eq.s32.totalorder %s27, 1
      %p155 = por %p153, %p154
      %p157 = scmp.ne.s32.totalorder %s140, %s156
      %p158 = scmp.eq.s32.totalorder %s27, 0
      %p159 = por %p157, %p158
      %s160 = ssub.s32 %s28, %s40
      %s161 = ssub.s32 %s29, %s36
      %s162 = sor.u32 %s160, %s161
      %p163 = scmp.eq.s32.totalorder %s162, 0
      %s165 = sadd.s32 %s164, 1
      %s166 = scalar_select %p163, %s164, %s165
      %p169 = pneg %p163
      %p170 = scmp.eq.s32.totalorder %s21, 1
      %p171 = por %p169, %p170
      %p172 = scmp.ne.s32.totalorder %s164, %s167
      %p173 = scmp.eq.s32.totalorder %s21, 0
      %p174 = por %p172, %p173
      %p175 = scmp.ne.s32.totalorder %s164, %s167
      %p176 = scmp.eq.s32.totalorder %s26, 1
      %p177 = por %p175, %p176
      %p178 = scmp.ne.s32.totalorder %s167, %s168
      %p179 = scmp.eq.s32.totalorder %s26, 0
      %p180 = por %p178, %p179
      %p181 = scmp.ne.s32.totalorder %s167, %s168
      %p182 = scmp.eq.s32.totalorder %s27, 1
      %p183 = por %p181, %p182
      %p185 = scmp.ne.s32.totalorder %s168, %s184
      %p186 = scmp.eq.s32.totalorder %s27, 0
      %p187 = por %p185, %p186
      %p188 = scmp.le.s32.totalorder 1, %s21
      %p189 = scmp.lt.s32.totalorder %s21, 3
      %p190 = pnand %p188, %p189
      %p191 = pneg %p190
      // Predicated region
      $region9: #{tpu_custom_call.1} parent=5 // pred_check
        _
      $region10: #{tpu_custom_call.1} parent=5 // pred_check_branch
        %193 = sbr.rel (%p190) target = $region12
      $region11: #{tpu_custom_call.1} parent=5 // pred_region
        %s194 = ssub.s32 %s21, 1
        // Predicated region
        $region13: #{tpu_custom_call.1} parent=11 // pred_check
          %p195 = pneg %p82
        $region14: #{tpu_custom_call.1} parent=11 // pred_check_branch
          %197 = sbr.rel (%p195) target = $region16
        $region15: #{tpu_custom_call.1} parent=11 // pred_region
          _
        $region16: #{tpu_custom_call.1} parent=11 // pred_fallthru
          _
        // Predicated region
        $region17: #{tpu_custom_call.1} parent=11 // pred_check
          %p198 = pneg %p103
        $region18: #{tpu_custom_call.1} parent=11 // pred_check_branch
          %200 = sbr.rel (%p198) target = $region20
        $region19: #{tpu_custom_call.1} parent=11 // pred_region
          _
        $region20: #{tpu_custom_call.1} parent=11 // pred_fallthru
          _
        // Predicated region
        $region21: #{tpu_custom_call.1} parent=11 // pred_check
          %p201 = pneg %p124
        $region22: #{tpu_custom_call.1} parent=11 // pred_check_branch
          %203 = sbr.rel (%p201) target = $region24
        $region23: #{tpu_custom_call.1} parent=11 // pred_region
          _
        $region24: #{tpu_custom_call.1} parent=11 // pred_fallthru
          _
      $region12: #{tpu_custom_call.1} parent=5 // pred_fallthru
        _
      %p204 = scmp.lt.s32.totalorder %s21, 2
      // Predicated region
      $region25: #{tpu_custom_call.1} parent=5 // pred_check
        %p205 = pneg %p204
      $region26: #{tpu_custom_call.1} parent=5 // pred_check_branch
        %207 = sbr.rel (%p205) target = $region28
      $region27: #{tpu_custom_call.1} parent=5 // pred_region
        // Predicated region
        $region29: #{tpu_custom_call.1} parent=27 // pred_check
          %p208 = pneg %p55
        $region30: #{tpu_custom_call.1} parent=27 // pred_check_branch
          %210 = sbr.rel (%p208) target = $region32
        $region31: #{tpu_custom_call.1} parent=27 // pred_region
          %s211 = sand.u32 %s45, 1
          %s212 = scalar_lea.sflag [#allocation3], %s211
          %s213 = sand.u32 %s45, 1
          %s214 = smul.addr %s213, 64
          %s215 = scalar_lea.vmem [#allocation2], %s214
          %s216 = smul.u32 2, %s29
          %s218 = ssub.s32 1024, 1024
          %219 = vsyncadd %s212, %s218
          %s220 = smul.addr %s28, 8
          %s221 = sadd.s32 %s216, %s220
          %s222 = smul.addr %s221, 128
          %s223 = scalar_lea.hbm %s0, %s222
          %s224 = sshll.u32 %s215, 4
          %s225 = int_to_ptr.vmem [resolvable:$true] %s224
          %230 = dma.hbm_to_vmem [thread:$0]  %s223, 1024, %s225, %s212, 256, 256, 16
        $region32: #{tpu_custom_call.1} parent=27 // pred_fallthru
          _
      $region28: #{tpu_custom_call.1} parent=5 // pred_fallthru
        _
      %p231 = scmp.le.s32.totalorder 1, %s21
      %p232 = scmp.lt.s32.totalorder %s21, 3
      %p233 = pnand %p231, %p232
      %p234 = pneg %p233
      // Predicated region
      $region33: #{tpu_custom_call.1} parent=5 // pred_check
        _
      $region34: #{tpu_custom_call.1} parent=5 // pred_check_branch
        %236 = sbr.rel (%p233) target = $region36
      $region35: #{tpu_custom_call.1} parent=5 // pred_region
        %s237 = ssub.s32 %s21, 1
        %s238 = sand.u32 %s48, 1
        %s239 = scalar_lea.sflag [#allocation3], %s238
        %s240 = sand.u32 %s48, 1
        %s241 = smul.addr %s240, 64
        %s242 = scalar_lea.vmem [#allocation2], %s241
        // Predicated region
        $region37: #{tpu_custom_call.1} parent=35 // pred_check
          %p243 = pneg %p61
        $region38: #{tpu_custom_call.1} parent=35 // pred_check_branch
          %245 = sbr.rel (%p243) target = $region40
        $region39: #{tpu_custom_call.1} parent=35 // pred_region
          %246 = dma.done %s239, 1024
        $region40: #{tpu_custom_call.1} parent=35 // pred_fallthru
          _
        %s247 = sand.u32 %s48, 1
        %s248 = scalar_lea.sflag [#allocation3], %s247
        %s249 = sand.u32 %s48, 1
        %s250 = smul.addr %s249, 64
        %s251 = scalar_lea.vmem [#allocation2], %s250
        %p252 = pneg %p61
        %p253 = pneg %p58
        %p254 = pneg %p82
        %p255 = pneg %p79
        %p256 = pneg %p103
        %p257 = pneg %p100
        %p258 = pneg %p124
        %p259 = pneg %p121
        %p260 = pneg %p152
        %p261 = pneg %p149
        %s262 = sand.u32 %s139, 1
        %s263 = scalar_lea.sflag [#allocation4], %s262
        %s264 = sand.u32 %s139, 1
        %s265 = smul.addr %s264, 64
        %s266 = scalar_lea.vmem [#allocation5], %s265
        %p267 = pneg %p180
        %p268 = pneg %p177
        %s269 = sand.u32 %s167, 1
        %s270 = scalar_lea.sflag [#allocation7], %s269
        %s271 = sand.u32 %s167, 1
        %s272 = smul.addr %s271, 8
        %s273 = scalar_lea.vmem [#allocation6], %s272
        %s274 = smul.u32 2, %s31
        %s275 = smul.u32 2, %s31
        %s276 = smul.u32 2, %s31
        %v277 = vld [vmem:[%s1] sm:$0xf]
        %v278 = vld [vmem:[%s2] sm:$0xff]
        %v279 = vld [vmem:[%s2 + $0x8] sm:$0xff]
        %v280 = vld [vmem:[%s2 + $0x10] sm:$0xff]
        %v281 = vld [vmem:[%s2 + $0x18] sm:$0xff]
        %v282 = vld [vmem:[%s3] sm:$0xff]
        %v283 = vld [vmem:[%s3 + $0x8] sm:$0xff]
        %v284 = vld [vmem:[%s3 + $0x10] sm:$0xff]
        %v285 = vld [vmem:[%s3 + $0x18] sm:$0xff]
        %v286 = vld [vmem:[%s242] sm:$0xff]
        %v287 = vld [vmem:[%s242 + $0x8] sm:$0xff]
        %v288 = vld [vmem:[%s242 + $0x10] sm:$0xff]
        %v289 = vld [vmem:[%s242 + $0x18] sm:$0xff]
        %v290 = vld [vmem:[%s242 + $0x20] sm:$0xff]
        %v291 = vld [vmem:[%s242 + $0x28] sm:$0xff]
        %v292 = vld [vmem:[%s242 + $0x30] sm:$0xff]
        %v293 = vld [vmem:[%s242 + $0x38] sm:$0xff]
        %vm294 = vcmask 261120
        %v296 = vsel %vm294, %v277, 0
        %298 = vmatprep.subr.mxu0 %v287
        %299 = vmatpush1.msra.mxu0 %v286
        %300 = vmatprep.subr.mxu0 %v289
        %301 = vmatpush1.msra.mxu0 %v288
        %302 = vmatprep.subr.mxu0 %v291
        %303 = vmatpush1.msra.mxu0 %v290
        %304 = vmatprep.subr.mxu0 %v293
        %305 = vmatpush1.msra.mxu0 %v292
        %306 = vmatprep.subr.mxu0 0.0
        %307 = vmatpush1.msra.mxu0 0.0
        %308 = vmatprep.subr.mxu0 0.0
        %309 = vmatpush1.msra.mxu0 0.0
        %310 = vmatprep.subr.mxu0 0.0
        %311 = vmatpush1.msra.mxu0 0.0
        %312 = vmatprep.subr.mxu0 0.0
        %313 = vmatpush1.msra.mxu0 0.0
        %314 = vmatprep.subr.mxu0 0.0
        %315 = vmatpush1.msra.mxu0 0.0
        %316 = vmatprep.subr.mxu0 0.0
        %317 = vmatpush1.msra.mxu0 0.0
        %318 = vmatprep.subr.mxu0 0.0
        %319 = vmatpush1.msra.mxu0 0.0
        %320 = vmatprep.subr.mxu0 0.0
        %321 = vmatpush1.msra.mxu0 0.0
        %322 = vmatprep.subr.mxu0 0.0
        %323 = vmatpush1.msra.mxu0 0.0
        %324 = vmatprep.subr.mxu0 0.0
        %325 = vmatpush1.msra.mxu0 0.0
        %326 = vmatprep.subr.mxu0 0.0
        %327 = vmatpush1.msra.mxu0 0.0
        %328 = vmatprep.subr.mxu0 0.0
        %329 = vmatpush1.msra.mxu0 0.0
        %330 = vmatprep.subr.mxu0 0.0
        %331 = vmatpush1.msra.mxu0 0.0
        %332 = vmatprep.subr.mxu0 0.0
        %333 = vmatpush1.msra.mxu0 0.0
        %334 = vmatprep.subr.mxu0 0.0
        %335 = vmatpush1.msra.mxu0 0.0
        %336 = vmatprep.subr.mxu0 0.0
        %337 = vmatpush1.msra.mxu0 0.0
        %338 = vmatprep.subr.mxu0 0.0
        %339 = vmatpush1.msra.mxu0 0.0
        %340 = vmatprep.subr.mxu0 0.0
        %341 = vmatpush1.msra.mxu0 0.0
        %342 = vmatprep.subr.mxu0 0.0
        %343 = vmatpush1.msra.mxu0 0.0
        %344 = vmatprep.subr.mxu0 0.0
        %345 = vmatpush1.msra.mxu0 0.0
        %346 = vmatprep.subr.mxu0 0.0
        %347 = vmatpush1.msra.mxu0 0.0
        %348 = vmatprep.subr.mxu0 0.0
        %349 = vmatpush1.msra.mxu0 0.0
        %350 = vmatprep.subr.mxu0 0.0
        %351 = vmatpush1.msra.mxu0 0.0
        %352 = vmatprep.subr.mxu0 0.0
        %353 = vmatpush1.msra.mxu0 0.0
        %354 = vmatprep.subr.mxu0 0.0
        %355 = vmatpush1.msra.mxu0 0.0
        %356 = vmatprep.subr.mxu0 0.0
        %357 = vmatpush1.msra.mxu0 0.0
        %358 = vmatprep.subr.mxu0 0.0
        %359 = vmatpush1.msra.mxu0 0.0
        %360 = vmatprep.subr.mxu0 0.0
        %361 = vmatpush1.msra.mxu0 0.0
        %362 = vmatprep.mubr.f32.mxu0 0.0
        %363 = vmatmul.mubr.f32.gmra.mrb[0].mxu0 %v296
        %v364 = vpop.f32.mrb[0].mxu0
        %v365 = vadd.f32 0.0, %v364
        %v366 = vpop.f32.mrb[0].mxu0
        %v367 = vadd.f32 0.0, %v366
        %368 = vdwg.mxu0
        %v371 = vcombine.low %v365, %v367
        %373 = vst [vmem:[%s273] sm:$0xff] %v371
        %375 = vset.pattern.permute.xlu0 0
        %376 = vperm.xlu0 %375, %v278
        %v377 = vpop.permute.xlu0 %376
        %380 = vset.pattern.permute.xlu0 0
        %381 = vperm.xlu0 %380, %v279
        %v382 = vpop.permute.xlu0 %381
        %385 = vset.pattern.permute.xlu0 0
        %386 = vperm.xlu0 %385, %v280
        %v387 = vpop.permute.xlu0 %386
        %390 = vset.pattern.permute.xlu0 0
        %391 = vperm.xlu0 %390, %v281
        %v392 = vpop.permute.xlu0 %391
        %v394 = vlaneseq
        %v395 = vshrl.u32 %v394, 7
        %v396 = vsub.s32 0, %v395
        %v397 = vrot.slane %v365, %v396
        %v398 = vlaneseq
        %v399 = vshrl.u32 %v398, 7
        %v400 = vsub.s32 0, %v399
        %v401 = vrot.slane %v367, %v400
        %v402 = vmul.f32 %v377, %v397
        %v403 = vmul.f32 %v377, %v401
        %v404 = vmul.f32 %v382, %v397
        %v405 = vmul.f32 %v382, %v401
        %v406 = vmul.f32 %v387, %v397
        %v407 = vmul.f32 %v387, %v401
        %v408 = vmul.f32 %v392, %v397
        %v409 = vmul.f32 %v392, %v401
        %411 = vset.pattern.permute.xlu0 0
        %412 = vperm.xlu0 %411, %v282
        %v413 = vpop.permute.xlu0 %412
        %416 = vset.pattern.permute.xlu0 0
        %417 = vperm.xlu0 %416, %v283
        %v418 = vpop.permute.xlu0 %417
        %421 = vset.pattern.permute.xlu0 0
        %422 = vperm.xlu0 %421, %v284
        %v423 = vpop.permute.xlu0 %422
        %426 = vset.pattern.permute.xlu0 0
        %427 = vperm.xlu0 %426, %v285
        %v428 = vpop.permute.xlu0 %427
        %v430 = vadd.f32 %v413, %v402
        %v431 = vadd.f32 %v413, %v403
        %v432 = vadd.f32 %v418, %v404
        %v433 = vadd.f32 %v418, %v405
        %v434 = vadd.f32 %v423, %v406
        %v435 = vadd.f32 %v423, %v407
        %v436 = vadd.f32 %v428, %v408
        %v437 = vadd.f32 %v428, %v409
        %438 = vset.pattern.permute.xlu0 1
        %439 = vperm.xlu0 %438, %v278
        %v440 = vpop.permute.xlu0 %439
        %442 = vset.pattern.permute.xlu0 1
        %443 = vperm.xlu0 %442, %v279
        %v444 = vpop.permute.xlu0 %443
        %446 = vset.pattern.permute.xlu0 1
        %447 = vperm.xlu0 %446, %v280
        %v448 = vpop.permute.xlu0 %447
        %450 = vset.pattern.permute.xlu0 1
        %451 = vperm.xlu0 %450, %v281
        %v452 = vpop.permute.xlu0 %451
        %v454 = vlaneseq
        %v455 = vshrl.u32 %v454, 7
        %v456 = vsub.s32 1, %v455
        %v457 = vrot.slane %v365, %v456
        %v458 = vlaneseq
        %v459 = vshrl.u32 %v458, 7
        %v460 = vsub.s32 1, %v459
        %v461 = vrot.slane %v367, %v460
        %v462 = vmul.f32 %v440, %v457
        %v463 = vmul.f32 %v440, %v461
        %v464 = vmul.f32 %v444, %v457
        %v465 = vmul.f32 %v444, %v461
        %v466 = vmul.f32 %v448, %v457
        %v467 = vmul.f32 %v448, %v461
        %v468 = vmul.f32 %v452, %v457
        %v469 = vmul.f32 %v452, %v461
        %v470 = vadd.f32 %v430, %v462
        %v471 = vadd.f32 %v431, %v463
        %v472 = vadd.f32 %v432, %v464
        %v473 = vadd.f32 %v433, %v465
        %v474 = vadd.f32 %v434, %v466
        %v475 = vadd.f32 %v435, %v467
        %v476 = vadd.f32 %v436, %v468
        %v477 = vadd.f32 %v437, %v469
        %478 = vset.pattern.permute.xlu0 2
        %479 = vperm.xlu0 %478, %v278
        %v480 = vpop.permute.xlu0 %479
        %482 = vset.pattern.permute.xlu0 2
        %483 = vperm.xlu0 %482, %v279
        %v484 = vpop.permute.xlu0 %483
        %486 = vset.pattern.permute.xlu0 2
        %487 = vperm.xlu0 %486, %v280
        %v488 = vpop.permute.xlu0 %487
        %490 = vset.pattern.permute.xlu0 2
        %491 = vperm.xlu0 %490, %v281
        %v492 = vpop.permute.xlu0 %491
        %v494 = vlaneseq
        %v495 = vshrl.u32 %v494, 7
        %v496 = vsub.s32 2, %v495
        %v497 = vrot.slane %v365, %v496
        %v498 = vlaneseq
        %v499 = vshrl.u32 %v498, 7
        %v500 = vsub.s32 2, %v499
        %v501 = vrot.slane %v367, %v500
        %v502 = vmul.f32 %v480, %v497
        %v503 = vmul.f32 %v480, %v501
        %v504 = vmul.f32 %v484, %v497
        %v505 = vmul.f32 %v484, %v501
        %v506 = vmul.f32 %v488, %v497
        %v507 = vmul.f32 %v488, %v501
        %v508 = vmul.f32 %v492, %v497
        %v509 = vmul.f32 %v492, %v501
        %v510 = vadd.f32 %v470, %v502
        %v511 = vadd.f32 %v471, %v503
        %v512 = vadd.f32 %v472, %v504
        %v513 = vadd.f32 %v473, %v505
        %v514 = vadd.f32 %v474, %v506
        %v515 = vadd.f32 %v475, %v507
        %v516 = vadd.f32 %v476, %v508
        %v517 = vadd.f32 %v477, %v509
        %518 = vset.pattern.permute.xlu0 3
        %519 = vperm.xlu0 %518, %v278
        %v520 = vpop.permute.xlu0 %519
        %522 = vset.pattern.permute.xlu0 3
        %523 = vperm.xlu0 %522, %v279
        %v524 = vpop.permute.xlu0 %523
        %526 = vset.pattern.permute.xlu0 3
        %527 = vperm.xlu0 %526, %v280
        %v528 = vpop.permute.xlu0 %527
        %530 = vset.pattern.permute.xlu0 3
        %531 = vperm.xlu0 %530, %v281
        %v532 = vpop.permute.xlu0 %531
        %v534 = vlaneseq
        %v535 = vshrl.u32 %v534, 7
        %v536 = vsub.s32 3, %v535
        %v537 = vrot.slane %v365, %v536
        %v538 = vlaneseq
        %v539 = vshrl.u32 %v538, 7
        %v540 = vsub.s32 3, %v539
        %v541 = vrot.slane %v367, %v540
        %v542 = vmul.f32 %v520, %v537
        %v543 = vmul.f32 %v520, %v541
        %v544 = vmul.f32 %v524, %v537
        %v545 = vmul.f32 %v524, %v541
        %v546 = vmul.f32 %v528, %v537
        %v547 = vmul.f32 %v528, %v541
        %v548 = vmul.f32 %v532, %v537
        %v549 = vmul.f32 %v532, %v541
        %v550 = vadd.f32 %v510, %v542
        %v551 = vadd.f32 %v511, %v543
        %v552 = vadd.f32 %v512, %v544
        %v553 = vadd.f32 %v513, %v545
        %v554 = vadd.f32 %v514, %v546
        %v555 = vadd.f32 %v515, %v547
        %v556 = vadd.f32 %v516, %v548
        %v557 = vadd.f32 %v517, %v549
        %v558 = vmax.f32 %v550, 0.0
        %v559 = vmax.f32 %v551, 0.0
        %v560 = vmax.f32 %v552, 0.0
        %v561 = vmax.f32 %v553, 0.0
        %v562 = vmax.f32 %v554, 0.0
        %v563 = vmax.f32 %v555, 0.0
        %v564 = vmax.f32 %v556, 0.0
        %v565 = vmax.f32 %v557, 0.0
        %566 = vst [vmem:[%s266] sm:$0xff] %v558
        %567 = vst [vmem:[%s266 + $0x8] sm:$0xff] %v559
        %568 = vst [vmem:[%s266 + $0x10] sm:$0xff] %v560
        %569 = vst [vmem:[%s266 + $0x18] sm:$0xff] %v561
        %570 = vst [vmem:[%s266 + $0x20] sm:$0xff] %v562
        %571 = vst [vmem:[%s266 + $0x28] sm:$0xff] %v563
        %572 = vst [vmem:[%s266 + $0x30] sm:$0xff] %v564
        %573 = vst [vmem:[%s266 + $0x38] sm:$0xff] %v565
        %s574 = sand.u32 %s139, 1
        %s575 = scalar_lea.sflag [#allocation4], %s574
        %s576 = sand.u32 %s139, 1
        %s577 = smul.addr %s576, 64
        %s578 = scalar_lea.vmem [#allocation5], %s577
        %s579 = sand.u32 %s167, 1
        %s580 = scalar_lea.sflag [#allocation7], %s579
        %s581 = sand.u32 %s167, 1
        %s582 = smul.addr %s581, 8
        %s583 = scalar_lea.vmem [#allocation6], %s582
        // Predicated region
        $region41: #{tpu_custom_call.1} parent=35 // pred_check
          %p584 = pneg %p149
        $region42: #{tpu_custom_call.1} parent=35 // pred_check_branch
          %586 = sbr.rel (%p584) target = $region44
        $region43: #{tpu_custom_call.1} parent=35 // pred_region
          %s587 = smul.u32 2, %s31
          %s589 = ssub.s32 1024, 1024
          %590 = vsyncadd %s575, %s589
          %s591 = smul.addr %s30, 8
          %s592 = sadd.s32 %s587, %s591
          %s593 = smul.addr %s592, 128
          %s594 = scalar_lea.hbm %s4, %s593
          %s595 = sshll.u32 %s578, 4
          %s596 = int_to_ptr.vmem [resolvable:$true] %s595
          %601 = dma.vmem_to_hbm [thread:$0]  %s596, 1024, %s594, %s575, 256, 256, 16
        $region44: #{tpu_custom_call.1} parent=35 // pred_fallthru
          _
        // Predicated region
        $region45: #{tpu_custom_call.1} parent=35 // pred_check
          %p602 = pneg %p177
        $region46: #{tpu_custom_call.1} parent=35 // pred_check_branch
          %604 = sbr.rel (%p602) target = $region48
        $region47: #{tpu_custom_call.1} parent=35 // pred_region
          %s605 = smul.u32 2, %s31
          %s607 = ssub.s32 128, 128
          %608 = vsyncadd %s580, %s607
          %s609 = smul.addr %s30, 2
          %s610 = sadd.s32 %s605, %s609
          %s611 = smul.addr %s610, 64
          %s612 = scalar_lea.hbm %s5, %s611
          %s614 = sshll.u32 %s583, 4
          %s615 = int_to_ptr.vmem [resolvable:$true] %s614
          %617 = dma.vmem_to_hbm [thread:$0]  %s615, 128, %s612, %s580
        $region48: #{tpu_custom_call.1} parent=35 // pred_fallthru
          _
      $region36: #{tpu_custom_call.1} parent=5 // pred_fallthru
        _
      %p618 = scmp.le.s32.totalorder 2, %s21
      // Predicated region
      $region49: #{tpu_custom_call.1} parent=5 // pred_check
        %p619 = pneg %p618
      $region50: #{tpu_custom_call.1} parent=5 // pred_check_branch
        %621 = sbr.rel (%p619) target = $region52
      $region51: #{tpu_custom_call.1} parent=5 // pred_region
        %s622 = ssub.s32 %s21, 2
        // Predicated region
        $region53: #{tpu_custom_call.1} parent=51 // pred_check
          %p623 = pneg %p155
        $region54: #{tpu_custom_call.1} parent=51 // pred_check_branch
          %625 = sbr.rel (%p623) target = $region56
        $region55: #{tpu_custom_call.1} parent=51 // pred_region
          %s626 = sand.u32 %s140, 1
          %s627 = scalar_lea.sflag [#allocation4], %s626
          %s628 = sand.u32 %s140, 1
          %s629 = smul.addr %s628, 64
          %s630 = scalar_lea.vmem [#allocation5], %s629
          %631 = dma.done %s627, 1024
        $region56: #{tpu_custom_call.1} parent=51 // pred_fallthru
          _
        // Predicated region
        $region57: #{tpu_custom_call.1} parent=51 // pred_check
          %p632 = pneg %p183
        $region58: #{tpu_custom_call.1} parent=51 // pred_check_branch
          %634 = sbr.rel (%p632) target = $region60
        $region59: #{tpu_custom_call.1} parent=51 // pred_region
          %s635 = sand.u32 %s168, 1
          %s636 = scalar_lea.sflag [#allocation7], %s635
          %s637 = sand.u32 %s168, 1
          %s638 = smul.addr %s637, 8
          %s639 = scalar_lea.vmem [#allocation6], %s638
          %640 = dma.done %s636, 128
        $region60: #{tpu_custom_call.1} parent=51 // pred_fallthru
          _
      $region52: #{tpu_custom_call.1} parent=5 // pred_fallthru
        _
    $region6: #{tpu_custom_call.1} parent=1 // loop_footer
      %s25 = sadd.s32 1, %s21
    $region7: #{tpu_custom_call.1} parent=1 // loop_footer_branch
      %20 = sbr.rel target = $region3
    $region8: #{tpu_custom_call.1} parent=1 // loop_exit
      _
    %641 = vsyncpa [#allocation3], 1
    %s642 = scalar_lea.sflag [#allocation3], 1
    %643 = vsyncpa %s642, 1
    %644 = vsyncpa [#allocation4], 1
    %s645 = scalar_lea.sflag [#allocation4], 1
    %646 = vsyncpa %s645, 1
    %647 = vsyncpa [#allocation7], 1
    %s648 = scalar_lea.sflag [#allocation7], 1
    %649 = vsyncpa %s648, 1

</llo_original>
